<compile_context>
chip_gen: v5e
topology: v5e:2x2
jax: 0.10.0
libtpu: 0.0.40
codegen_flags: <defaults>
</compile_context>

<pallas_src>
import functools

import jax
import jax.numpy as jnp
from jax import lax
from jax.experimental import pallas as pl
from jax.experimental.pallas import tpu as pltpu

_LANES = 128  # lane width; softmax stats are kept lane-replicated at this width
_VMEM_LIMIT = 48 * 1024 * 1024  # explicit scoped-VMEM budget (safe on v5e/v6e/v7x)


# ----------------------------------------------------------------------------
# Pass 1: Q/K/V projections (per batch, per seq tile).
# ----------------------------------------------------------------------------
def _proj_kernel(x_ref, wq_ref, wk_ref, wv_ref, bq_ref, q_ref, k_ref, v_ref):
    x = x_ref[...]                                                 # (TS, E) bf16
    # Q: scale already folded into wq/bq by the wrapper.
    q = jnp.dot(x, wq_ref[...], preferred_element_type=jnp.float32) + bq_ref[...]
    q_ref[...] = q.astype(q_ref.dtype)
    # K: bias dropped exactly (softmax shift invariance over the key axis).
    k_ref[...] = jnp.dot(x, wk_ref[...],
                         preferred_element_type=jnp.float32).astype(k_ref.dtype)
    # V: bias applied once in the attention epilogue (softmax rows sum to 1).
    v_ref[...] = jnp.dot(x, wv_ref[...],
                         preferred_element_type=jnp.float32).astype(v_ref.dtype)


# ----------------------------------------------------------------------------
# Pass 2: flash attention inner loop.
# ----------------------------------------------------------------------------
def _bcast_lanes(stat, n):
    """Broadcast a (rows, _LANES) lane-replicated stat to (rows, n)."""
    if n == stat.shape[-1]:
        return stat
    if n % stat.shape[-1] == 0:
        return jnp.tile(stat, (1, n // stat.shape[-1]))
    return jnp.broadcast_to(stat[:, :1], (stat.shape[0], n))


def _flash_kernel(q_ref, k_ref, v_ref, bv_ref, o_ref, m_sc, l_sc, acc_sc):
    kv = pl.program_id(2)

    @pl.when(kv == 0)
    def _():
        m_sc[...] = jnp.full_like(m_sc, -jnp.inf)
        l_sc[...] = jnp.zeros_like(l_sc)
        acc_sc[...] = jnp.zeros_like(acc_sc)

    q = q_ref[...]                                   # (TQ, E) bf16, pre-scaled
    k = k_ref[...]                                   # (TK, E) bf16
    # Scores: contract E directly; transpose folded into the MXU op.
    s = lax.dot_general(q, k, (((1,), (1,)), ((), ())),
                        preferred_element_type=jnp.float32)        # (TQ, TK) f32

    # Online softmax with lane-replicated running stats.
    m_prev = m_sc[...]                                             # (TQ, 128)
    m_cur = jnp.max(s, axis=-1, keepdims=True)                     # (TQ, 1)
    m_next = jnp.maximum(m_prev, m_cur)                            # (TQ, 128)
    alpha = jnp.exp(m_prev - m_next)                               # (TQ, 128)
    # TODO(synk): on v6e/v7x (bf16 EUP) the exp could run in bf16 for ~2x EUP.
    p = jnp.exp(s - _bcast_lanes(m_next, s.shape[-1]))             # (TQ, TK) f32

    l_sc[...] = alpha * l_sc[...] + jnp.sum(p, axis=-1, keepdims=True)
    pv = jnp.dot(p.astype(v_ref.dtype), v_ref[...],
                 preferred_element_type=jnp.float32)               # (TQ, E) f32
    acc_sc[...] = acc_sc[...] * _bcast_lanes(alpha, acc_sc.shape[-1]) + pv
    m_sc[...] = m_next

    @pl.when(kv == pl.num_programs(2) - 1)
    def _():
        inv_l = pl.reciprocal(l_sc[...], approx=True)              # EUP vrcp
        o_ref[...] = (acc_sc[...] * _bcast_lanes(inv_l, acc_sc.shape[-1])
                      + bv_ref[...]).astype(o_ref.dtype)


# ----------------------------------------------------------------------------
# Wrapper.
# ----------------------------------------------------------------------------
def _pick_tile(s):
    for t in (256, 128):
        if s % t == 0:
            return t
    return s  # fallback: whole-S block (prefer padding for large, odd S)


def self_attention(x, wq, wk, wv, bq, bk, bv, *, tq=None, tk=None, ts=None):
    """x: (B, S, E) f32; w*: (E, E) pre-transposed to (in, out); b*: (1, E).

    Matches torch: softmax((xWq+bq)(xWk+bk)^T / sqrt(E)) @ (xWv+bv).
    """
    del bk  # exactly cancelled by the row-wise softmax (shift invariance)
    B, S, E = x.shape
    scale = 1.0 / (float(E) ** 0.5)

    tq = tq or _pick_tile(S)
    tk = tk or _pick_tile(S)
    ts = ts or _pick_tile(S)

    # bf16 MXU operands (f32 accumulation inside the kernels); 1/sqrt(E)
    # folded into the Q projection weights/bias once, in f32, by XLA.
    x_b = x.astype(jnp.bfloat16)
    wq_b = (wq * scale).astype(jnp.bfloat16)
    bq_s = (bq * scale).astype(jnp.float32)
    wk_b = wk.astype(jnp.bfloat16)
    wv_b = wv.astype(jnp.bfloat16)
    bv_f = bv.astype(jnp.float32)

    # ---- Pass 1: Q/K/V projections (once per token). ----
    q, k, v = pl.pallas_call(
        _proj_kernel,
        out_shape=(jax.ShapeDtypeStruct((B, S, E), jnp.bfloat16),) * 3,
        grid_spec=pltpu.PrefetchScalarGridSpec(
            num_scalar_prefetch=0,
            grid=(B, S // ts),
            in_specs=[
                pl.BlockSpec((pl.Squeezed(), ts, E), lambda b, si: (b, si, 0)),
                pl.BlockSpec((E, E), lambda b, si: (0, 0)),   # Wq (pre-scaled)
                pl.BlockSpec((E, E), lambda b, si: (0, 0)),   # Wk
                pl.BlockSpec((E, E), lambda b, si: (0, 0)),   # Wv
                pl.BlockSpec((1, E), lambda b, si: (0, 0)),   # bq (pre-scaled)
            ],
            out_specs=[
                pl.BlockSpec((pl.Squeezed(), ts, E), lambda b, si: (b, si, 0)),
                pl.BlockSpec((pl.Squeezed(), ts, E), lambda b, si: (b, si, 0)),
                pl.BlockSpec((pl.Squeezed(), ts, E), lambda b, si: (b, si, 0)),
            ],
        ),
        compiler_params=pltpu.CompilerParams(
            dimension_semantics=("parallel", "parallel"),
            vmem_limit_bytes=_VMEM_LIMIT),
    )(x_b, wq_b, wk_b, wv_b, bq_s)

    # ---- Pass 2: flash attention. ----
    out = pl.pallas_call(
        _flash_kernel,
        out_shape=jax.ShapeDtypeStruct((B, S, E), x.dtype),
        grid_spec=pltpu.PrefetchScalarGridSpec(
            num_scalar_prefetch=0,
            grid=(B, S // tq, S // tk),
            in_specs=[
                pl.BlockSpec((pl.Squeezed(), tq, E), lambda b, qi, ki: (b, qi, 0)),
                pl.BlockSpec((pl.Squeezed(), tk, E), lambda b, qi, ki: (b, ki, 0)),
                pl.BlockSpec((pl.Squeezed(), tk, E), lambda b, qi, ki: (b, ki, 0)),
                pl.BlockSpec((1, E), lambda b, qi, ki: (0, 0)),   # bv
            ],
            out_specs=pl.BlockSpec((pl.Squeezed(), tq, E),
                                   lambda b, qi, ki: (b, qi, 0)),
            scratch_shapes=[
                pltpu.VMEM((tq, _LANES), jnp.float32),   # running row max
                pltpu.VMEM((tq, _LANES), jnp.float32),   # running softmax denom
                pltpu.VMEM((tq, E), jnp.float32),        # output accumulator
            ],
        ),
        compiler_params=pltpu.CompilerParams(
            dimension_semantics=("parallel", "parallel", "arbitrary"),
            vmem_limit_bytes=_VMEM_LIMIT),
    )(q, k, v, bv_f)
    return out


def _reference(x, wq, wk, wv, bq, bk, bv):
    # Pure-JAX f32 reference matching the PyTorch forward.
    e = x.shape[-1]
    q = x @ wq + bq
    k = x @ wk + bk
    v = x @ wv + bv
    s = (q @ jnp.swapaxes(k, -2, -1)) / (e ** 0.5)
    a = jax.nn.softmax(s, axis=-1)
    return a @ v


if __name__ == "__main__":
    # Small but lane-dense / MXU-friendly shapes: batch=2, seq=256, embed=128.
    B, S, E = 2, 256, 128

    key = jax.random.PRNGKey(0)
    kx, kwq, kwk, kwv, kbq, kbk, kbv = jax.random.split(key, 7)

    x = jax.random.normal(kx, (B, S, E), dtype=jnp.float32)

    # nn.Linear(embed_size, embed_size)-style init, stored pre-transposed (in, out).
    bound = 1.0 / (E ** 0.5)
    wq = jax.random.uniform(kwq, (E, E), jnp.float32, -bound, bound)
    wk = jax.random.uniform(kwk, (E, E), jnp.float32, -bound, bound)
    wv = jax.random.uniform(kwv, (E, E), jnp.float32, -bound, bound)
    bq = jax.random.uniform(kbq, (1, E), jnp.float32, -bound, bound)
    bk = jax.random.uniform(kbk, (1, E), jnp.float32, -bound, bound)
    bv = jax.random.uniform(kbv, (1, E), jnp.float32, -bound, bound)

    out = self_attention(x, wq, wk, wv, bq, bk, bv)
    out = jax.block_until_ready(out)

    ref = _reference(x, wq, wk, wv, bq, bk, bv)
    assert out.shape == (B, S, E)
    # bf16 MXU operands + online softmax + approx reciprocal vs f32 reference.
    max_err = jnp.max(jnp.abs(out - ref))
    assert jnp.allclose(out, ref, atol=2e-2, rtol=2e-2), f"max err {max_err}"

    print("KERNEL_OK")
</pallas_src>

<mosaic_0001>
module attributes {stable_mosaic.version = 11 : i64} {
  func.func @_proj_kernel(%arg0: i32, %arg1: i32, %arg2: memref<1x256x128xbf16, #tpu.memory_space<vmem>>, %arg3: memref<128x128xbf16, #tpu.memory_space<vmem>>, %arg4: memref<128x128xbf16, #tpu.memory_space<vmem>>, %arg5: memref<128x128xbf16, #tpu.memory_space<vmem>>, %arg6: memref<1x128xf32, #tpu.memory_space<vmem>>, %arg7: memref<1x256x128xbf16, #tpu.memory_space<vmem>>, %arg8: memref<1x256x128xbf16, #tpu.memory_space<vmem>>, %arg9: memref<1x256x128xbf16, #tpu.memory_space<vmem>>) attributes {dimension_semantics = [#tpu.dimension_semantics<parallel>, #tpu.dimension_semantics<parallel>], iteration_bounds = array<i64: 2, 1>, scalar_prefetch = 0 : i64, scratch_operands = 0 : i64, tpu.core_type = #tpu.core_type<tc>, window_params = [{transform_indices = @transform_0, window_bounds = array<i64: 1, 256, 128>}, {pipeline_mode = #tpu.pipeline_mode<synchronous>, transform_indices = @transform_1, window_bounds = array<i64: 128, 128>}, {pipeline_mode = #tpu.pipeline_mode<synchronous>, transform_indices = @transform_2, window_bounds = array<i64: 128, 128>}, {pipeline_mode = #tpu.pipeline_mode<synchronous>, transform_indices = @transform_3, window_bounds = array<i64: 128, 128>}, {pipeline_mode = #tpu.pipeline_mode<synchronous>, transform_indices = @transform_4, window_bounds = array<i64: 1, 128>}, {transform_indices = @transform_5, window_bounds = array<i64: 1, 256, 128>}, {transform_indices = @transform_6, window_bounds = array<i64: 1, 256, 128>}, {transform_indices = @transform_7, window_bounds = array<i64: 1, 256, 128>}]} {
    %c0 = arith.constant 0 : index
    %c0_0 = arith.constant 0 : index
    %c0_1 = arith.constant 0 : index
    %0 = vector.load %arg2[%c0, %c0_0, %c0_1] : memref<1x256x128xbf16, #tpu.memory_space<vmem>>, vector<1x256x128xbf16>
    %1 = vector.shape_cast %0 : vector<1x256x128xbf16> to vector<256x128xbf16>
    %c0_2 = arith.constant 0 : index
    %c0_3 = arith.constant 0 : index
    %2 = vector.load %arg3[%c0_2, %c0_3] : memref<128x128xbf16, #tpu.memory_space<vmem>>, vector<128x128xbf16>
    %cst = arith.constant dense<0.000000e+00> : vector<256x128xf32>
    %3 = tpu.matmul %1, %2, %cst {dimension_numbers = #tpu.dot_dimension_numbers<[1], [0], [0], [1], [0, 0, 1, 1], [], []>} : vector<256x128xbf16>, vector<128x128xbf16>, vector<256x128xf32> -> vector<256x128xf32>
    %c0_4 = arith.constant 0 : index
    %c0_5 = arith.constant 0 : index
    %4 = vector.load %arg6[%c0_4, %c0_5] : memref<1x128xf32, #tpu.memory_space<vmem>>, vector<1x128xf32>
    %5 = vector.broadcast %4 : vector<1x128xf32> to vector<256x128xf32>
    %6 = arith.addf %3, %5 : vector<256x128xf32>
    %7 = arith.truncf %6 : vector<256x128xf32> to vector<256x128xbf16>
    %c0_6 = arith.constant 0 : index
    %c0_7 = arith.constant 0 : index
    %c0_8 = arith.constant 0 : index
    %8 = vector.load %arg7[%c0_6, %c0_7, %c0_8] : memref<1x256x128xbf16, #tpu.memory_space<vmem>>, vector<1x256x128xbf16>
    %9 = vector.shape_cast %8 : vector<1x256x128xbf16> to vector<256x128xbf16>
    %10 = vector.shape_cast %7 : vector<256x128xbf16> to vector<1x256x128xbf16>
    tpu.vector_store %arg7[%c0_6, %c0_7, %c0_8], %10 {strides = array<i32>} : memref<1x256x128xbf16, #tpu.memory_space<vmem>>, vector<1x256x128xbf16>,
    %c0_9 = arith.constant 0 : index
    %c0_10 = arith.constant 0 : index
    %11 = vector.load %arg4[%c0_9, %c0_10] : memref<128x128xbf16, #tpu.memory_space<vmem>>, vector<128x128xbf16>
    %cst_11 = arith.constant dense<0.000000e+00> : vector<256x128xf32>
    %12 = tpu.matmul %1, %11, %cst_11 {dimension_numbers = #tpu.dot_dimension_numbers<[1], [0], [0], [1], [0, 0, 1, 1], [], []>} : vector<256x128xbf16>, vector<128x128xbf16>, vector<256x128xf32> -> vector<256x128xf32>
    %13 = arith.truncf %12 : vector<256x128xf32> to vector<256x128xbf16>
    %c0_12 = arith.constant 0 : index
    %c0_13 = arith.constant 0 : index
    %c0_14 = arith.constant 0 : index
    %14 = vector.load %arg8[%c0_12, %c0_13, %c0_14] : memref<1x256x128xbf16, #tpu.memory_space<vmem>>, vector<1x256x128xbf16>
    %15 = vector.shape_cast %14 : vector<1x256x128xbf16> to vector<256x128xbf16>
    %16 = vector.shape_cast %13 : vector<256x128xbf16> to vector<1x256x128xbf16>
    tpu.vector_store %arg8[%c0_12, %c0_13, %c0_14], %16 {strides = array<i32>} : memref<1x256x128xbf16, #tpu.memory_space<vmem>>, vector<1x256x128xbf16>,
    %c0_15 = arith.constant 0 : index
    %c0_16 = arith.constant 0 : index
    %17 = vector.load %arg5[%c0_15, %c0_16] : memref<128x128xbf16, #tpu.memory_space<vmem>>, vector<128x128xbf16>
    %cst_17 = arith.constant dense<0.000000e+00> : vector<256x128xf32>
    %18 = tpu.matmul %1, %17, %cst_17 {dimension_numbers = #tpu.dot_dimension_numbers<[1], [0], [0], [1], [0, 0, 1, 1], [], []>} : vector<256x128xbf16>, vector<128x128xbf16>, vector<256x128xf32> -> vector<256x128xf32>
    %19 = arith.truncf %18 : vector<256x128xf32> to vector<256x128xbf16>
    %c0_18 = arith.constant 0 : index
    %c0_19 = arith.constant 0 : index
    %c0_20 = arith.constant 0 : index
    %20 = vector.load %arg9[%c0_18, %c0_19, %c0_20] : memref<1x256x128xbf16, #tpu.memory_space<vmem>>, vector<1x256x128xbf16>
    %21 = vector.shape_cast %20 : vector<1x256x128xbf16> to vector<256x128xbf16>
    %22 = vector.shape_cast %19 : vector<256x128xbf16> to vector<1x256x128xbf16>
    tpu.vector_store %arg9[%c0_18, %c0_19, %c0_20], %22 {strides = array<i32>} : memref<1x256x128xbf16, #tpu.memory_space<vmem>>, vector<1x256x128xbf16>,
    return
  }
  func.func @transform_0(%arg0: i32, %arg1: i32) -> (i32, i32, i32) {
    %c0_i32 = arith.constant 0 : i32
    %c0_i32_0 = arith.constant 0 : i32
    return %arg0, %arg1, %c0_i32 : i32, i32, i32
  }
  func.func @transform_1(%arg0: i32, %arg1: i32) -> (i32, i32) {
    %c0_i32 = arith.constant 0 : i32
    %c0_i32_0 = arith.constant 0 : i32
    %c0_i32_1 = arith.constant 0 : i32
    return %c0_i32, %c0_i32_0 : i32, i32
  }
  func.func @transform_2(%arg0: i32, %arg1: i32) -> (i32, i32) {
    %c0_i32 = arith.constant 0 : i32
    %c0_i32_0 = arith.constant 0 : i32
    %c0_i32_1 = arith.constant 0 : i32
    return %c0_i32, %c0_i32_0 : i32, i32
  }
  func.func @transform_3(%arg0: i32, %arg1: i32) -> (i32, i32) {
    %c0_i32 = arith.constant 0 : i32
    %c0_i32_0 = arith.constant 0 : i32
    %c0_i32_1 = arith.constant 0 : i32
    return %c0_i32, %c0_i32_0 : i32, i32
  }
  func.func @transform_4(%arg0: i32, %arg1: i32) -> (i32, i32) {
    %c0_i32 = arith.constant 0 : i32
    %c0_i32_0 = arith.constant 0 : i32
    %c0_i32_1 = arith.constant 0 : i32
    return %c0_i32, %c0_i32_0 : i32, i32
  }
  func.func @transform_5(%arg0: i32, %arg1: i32) -> (i32, i32, i32) {
    %c0_i32 = arith.constant 0 : i32
    %c0_i32_0 = arith.constant 0 : i32
    return %arg0, %arg1, %c0_i32 : i32, i32, i32
  }
  func.func @transform_6(%arg0: i32, %arg1: i32) -> (i32, i32, i32) {
    %c0_i32 = arith.constant 0 : i32
    %c0_i32_0 = arith.constant 0 : i32
    return %arg0, %arg1, %c0_i32 : i32, i32, i32
  }
  func.func @transform_7(%arg0: i32, %arg1: i32) -> (i32, i32, i32) {
    %c0_i32 = arith.constant 0 : i32
    %c0_i32_0 = arith.constant 0 : i32
    return %arg0, %arg1, %c0_i32 : i32, i32, i32
  }
}

</mosaic_0001>

<llo_original>
// kernel: tpu_custom_call.1
$region0: #{tpu_custom_call.1}
  #allocation0 [shape = 'u32[]', space=smem, size = 0x4, offset = 0x4, fixed_abs, tag = 'smem constant byte address 0x4 - core index']
  #allocation1 [shape = 'u32[72,128]{1,0:T(1,128)}', space=vmem, size = 0x9000, scoped, tag = 'internal scratch']
  %s0 = inlined_call_operand.hbm [shape: bf16[2,256,128], index: 0, kind: input, shape index: {}]
  %s1 = inlined_call_operand.hbm [shape: bf16[128,128], index: 1, kind: input, shape index: {}]
  %s2 = inlined_call_operand.hbm [shape: bf16[128,128], index: 2, kind: input, shape index: {}]
  %s3 = inlined_call_operand.hbm [shape: bf16[128,128], index: 3, kind: input, shape index: {}]
  %s4 = inlined_call_operand.vmem [shape: f32[1,128], index: 4, kind: input, shape index: {}]
  %s5 = inlined_call_operand.hbm [shape: bf16[2,256,128], index: 5, kind: output, shape index: {0}]
  %s6 = inlined_call_operand.hbm [shape: bf16[2,256,128], index: 6, kind: output, shape index: {1}]
  %s7 = inlined_call_operand.hbm [shape: bf16[2,256,128], index: 7, kind: output, shape index: {2}]
  %8 = xla_tuple %s5, %s6, %s7
  %s9 = sld [smem:[#allocation0]]
  $region85: #{tpu_custom_call.1} parent=0
    _
  %s11 = ssub.s32 1, %s9
  %s12 = scalar_select 0, %s11, %s9
  $region1: #{tpu_custom_call.1} parent=0
    #allocation2 [shape = 'u8[131072]{0}', space=vmem, size = 0x20000, scoped, tag = 'input window, operand 0']
    #allocation3 [shape = 's32[2]{0}', space=sflag, size = 0x8, scoped, tag = 'scoped memory for tpu_custom_call.1']
    #allocation4 [shape = 's32[2]{0}', space=sflag, size = 0x8, scoped, tag = 'scoped memory for tpu_custom_call.1']
    #allocation5 [shape = 'u8[32768]{0}', space=vmem, size = 0x8000, scoped, tag = 'input window, operand 1, single buffered']
    #allocation6 [shape = 's32[1]{0}', space=sflag, size = 0x4, scoped, tag = 'scoped memory for tpu_custom_call.1']
    #allocation7 [shape = 'u8[32768]{0}', space=vmem, size = 0x8000, scoped, tag = 'input window, operand 2, single buffered']
    #allocation8 [shape = 'u8[32768]{0}', space=vmem, size = 0x8000, scoped, tag = 'input window, operand 3, single buffered']
    #allocation9 [shape = 's32[1]{0}', space=sflag, size = 0x4, scoped, tag = 'scoped memory for tpu_custom_call.1']
    #allocation10 [shape = 'u8[131072]{0}', space=vmem, size = 0x20000, scoped, tag = 'output window, operand 0']
    #allocation11 [shape = 'u8[131072]{0}', space=vmem, size = 0x20000, scoped, tag = 'output window, operand 1']
    #allocation12 [shape = 's32[2]{0}', space=sflag, size = 0x8, scoped, tag = 'scoped memory for tpu_custom_call.1']
    #allocation13 [shape = 'u8[131072]{0}', space=vmem, size = 0x20000, scoped, tag = 'output window, operand 2']
    %13 = vsyncpa [#allocation3], 0
    %s14 = scalar_lea.sflag [#allocation3], 1
    %15 = vsyncpa %s14, 0
    %16 = vsyncpa [#allocation6], 0
    %17 = vsyncpa [#allocation9], 0
    %18 = vsyncpa [#allocation4], 0
    %s19 = scalar_lea.sflag [#allocation4], 1
    %20 = vsyncpa %s19, 0
    %21 = vsyncpa [#allocation12], 0
    %s22 = scalar_lea.sflag [#allocation12], 1
    %23 = vsyncpa %s22, 0
    loop: start=0, step=1, limit=4
    $region2: #{tpu_custom_call.1} parent=1 // loop_pre_header
      _
    $region3: #{tpu_custom_call.1} parent=1 // loop_header
      %s25 = sphi 0, %s29
      %p26 = scmp.ge.s32.totalorder %s25, 4
      %s32 = sphi 0, %s44
      %s33 = sphi 0, %s40
      %s34 = sphi 0, %s32
      %s35 = sphi 0, %s33
      %s36 = sphi 0, %s34
      %s37 = sphi 0, %s35
      %s49 = sphi 0, %s51
      %s52 = sphi 0, %s49
      %s53 = sphi 0, %s52
      %s69 = sphi 0, %s53
      %s73 = sphi 0, %s73
      %s75 = sphi 0, %s73
      %s76 = sphi 0, %s75
      %s90 = sphi 0, %s76
      %s94 = sphi 0, %s94
      %s96 = sphi 0, %s94
      %s97 = sphi 0, %s96
      %s111 = sphi 0, %s97
      %s115 = sphi 0, %s115
      %s117 = sphi 0, %s115
      %s118 = sphi 0, %s117
      %s132 = sphi 0, %s118
      %s136 = sphi 0, %s136
      %s138 = sphi 0, %s136
      %s139 = sphi 0, %s138
      %s153 = sphi 0, %s139
      %s161 = sphi 0, %s163
      %s164 = sphi 0, %s161
      %s165 = sphi 0, %s164
      %s181 = sphi 0, %s165
      %s189 = sphi 0, %s191
      %s192 = sphi 0, %s189
      %s193 = sphi 0, %s192
      %s209 = sphi 0, %s193
      %s217 = sphi 0, %s219
      %s220 = sphi 0, %s217
      %s221 = sphi 0, %s220
      %s237 = sphi 0, %s221
    $region4: #{tpu_custom_call.1} parent=1 // loop_header_branch
      %28 = sbr.rel (%p26) target = $region8
    $region5: #{tpu_custom_call.1} parent=1 // loop_body
      %s30 = ssub.s32 %s25, 1
      %s31 = ssub.s32 %s25, 2
      %s38 = sadd.s32 1, %s33
      %p39 = scmp.ge.s32.totalorder %s38, 1
      %s40 = scalar_select %p39, 0, %s38
      %s41 = sadd.s32 1, %s32
      %s42 = scalar_select %p39, %s41, %s32
      %p43 = scmp.ge.s32.totalorder %s42, 2
      %s44 = scalar_select %p43, 0, %s42
      %s45 = ssub.s32 %s32, %s44
      %s46 = ssub.s32 %s33, %s40
      %s47 = sor.u32 %s45, %s46
      %p48 = scmp.eq.s32.totalorder %s47, 0
      %s50 = sadd.s32 %s49, 1
      %s51 = scalar_select %p48, %s49, %s50
      %p54 = pneg %p48
      %p55 = scmp.eq.s32.totalorder %s25, 1
      %p56 = por %p54, %p55
      %p57 = scmp.ne.s32.totalorder %s49, %s52
      %p58 = scmp.eq.s32.totalorder %s25, 0
      %p59 = por %p57, %p58
      %p60 = scmp.ne.s32.totalorder %s49, %s52
      %p61 = scmp.eq.s32.totalorder %s30, 1
      %p62 = por %p60, %p61
      %p63 = scmp.ne.s32.totalorder %s52, %s53
      %p64 = scmp.eq.s32.totalorder %s30, 0
      %p65 = por %p63, %p64
      %p66 = scmp.ne.s32.totalorder %s52, %s53
      %p67 = scmp.eq.s32.totalorder %s31, 1
      %p68 = por %p66, %p67
      %p70 = scmp.ne.s32.totalorder %s53, %s69
      %p71 = scmp.eq.s32.totalorder %s31, 0
      %p72 = por %p70, %p71
      %s74 = sadd.s32 %s73, 1
      %p77 = scmp.eq.s32.totalorder %s25, 1
      %p78 = scmp.ne.s32.totalorder %s73, %s75
      %p79 = scmp.eq.s32.totalorder %s25, 0
      %p80 = por %p78, %p79
      %p81 = scmp.ne.s32.totalorder %s73, %s75
      %p82 = scmp.eq.s32.totalorder %s30, 1
      %p83 = por %p81, %p82
      %p84 = scmp.ne.s32.totalorder %s75, %s76
      %p85 = scmp.eq.s32.totalorder %s30, 0
      %p86 = por %p84, %p85
      %p87 = scmp.ne.s32.totalorder %s75, %s76
      %p88 = scmp.eq.s32.totalorder %s31, 1
      %p89 = por %p87, %p88
      %p91 = scmp.ne.s32.totalorder %s76, %s90
      %p92 = scmp.eq.s32.totalorder %s31, 0
      %p93 = por %p91, %p92
      %s95 = sadd.s32 %s94, 1
      %p98 = scmp.eq.s32.totalorder %s25, 1
      %p99 = scmp.ne.s32.totalorder %s94, %s96
      %p100 = scmp.eq.s32.totalorder %s25, 0
      %p101 = por %p99, %p100
      %p102 = scmp.ne.s32.totalorder %s94, %s96
      %p103 = scmp.eq.s32.totalorder %s30, 1
      %p104 = por %p102, %p103
      %p105 = scmp.ne.s32.totalorder %s96, %s97
      %p106 = scmp.eq.s32.totalorder %s30, 0
      %p107 = por %p105, %p106
      %p108 = scmp.ne.s32.totalorder %s96, %s97
      %p109 = scmp.eq.s32.totalorder %s31, 1
      %p110 = por %p108, %p109
      %p112 = scmp.ne.s32.totalorder %s97, %s111
      %p113 = scmp.eq.s32.totalorder %s31, 0
      %p114 = por %p112, %p113
      %s116 = sadd.s32 %s115, 1
      %p119 = scmp.eq.s32.totalorder %s25, 1
      %p120 = scmp.ne.s32.totalorder %s115, %s117
      %p121 = scmp.eq.s32.totalorder %s25, 0
      %p122 = por %p120, %p121
      %p123 = scmp.ne.s32.totalorder %s115, %s117
      %p124 = scmp.eq.s32.totalorder %s30, 1
      %p125 = por %p123, %p124
      %p126 = scmp.ne.s32.totalorder %s117, %s118
      %p127 = scmp.eq.s32.totalorder %s30, 0
      %p128 = por %p126, %p127
      %p129 = scmp.ne.s32.totalorder %s117, %s118
      %p130 = scmp.eq.s32.totalorder %s31, 1
      %p131 = por %p129, %p130
      %p133 = scmp.ne.s32.totalorder %s118, %s132
      %p134 = scmp.eq.s32.totalorder %s31, 0
      %p135 = por %p133, %p134
      %s137 = sadd.s32 %s136, 1
      %p140 = scmp.eq.s32.totalorder %s25, 1
      %p141 = scmp.ne.s32.totalorder %s136, %s138
      %p142 = scmp.eq.s32.totalorder %s25, 0
      %p143 = por %p141, %p142
      %p144 = scmp.ne.s32.totalorder %s136, %s138
      %p145 = scmp.eq.s32.totalorder %s30, 1
      %p146 = por %p144, %p145
      %p147 = scmp.ne.s32.totalorder %s138, %s139
      %p148 = scmp.eq.s32.totalorder %s30, 0
      %p149 = por %p147, %p148
      %p150 = scmp.ne.s32.totalorder %s138, %s139
      %p151 = scmp.eq.s32.totalorder %s31, 1
      %p152 = por %p150, %p151
      %p154 = scmp.ne.s32.totalorder %s139, %s153
      %p155 = scmp.eq.s32.totalorder %s31, 0
      %p156 = por %p154, %p155
      %s157 = ssub.s32 %s32, %s44
      %s158 = ssub.s32 %s33, %s40
      %s159 = sor.u32 %s157, %s158
      %p160 = scmp.eq.s32.totalorder %s159, 0
      %s162 = sadd.s32 %s161, 1
      %s163 = scalar_select %p160, %s161, %s162
      %p166 = pneg %p160
      %p167 = scmp.eq.s32.totalorder %s25, 1
      %p168 = por %p166, %p167
      %p169 = scmp.ne.s32.totalorder %s161, %s164
      %p170 = scmp.eq.s32.totalorder %s25, 0
      %p171 = por %p169, %p170
      %p172 = scmp.ne.s32.totalorder %s161, %s164
      %p173 = scmp.eq.s32.totalorder %s30, 1
      %p174 = por %p172, %p173
      %p175 = scmp.ne.s32.totalorder %s164, %s165
      %p176 = scmp.eq.s32.totalorder %s30, 0
      %p177 = por %p175, %p176
      %p178 = scmp.ne.s32.totalorder %s164, %s165
      %p179 = scmp.eq.s32.totalorder %s31, 1
      %p180 = por %p178, %p179
      %p182 = scmp.ne.s32.totalorder %s165, %s181
      %p183 = scmp.eq.s32.totalorder %s31, 0
      %p184 = por %p182, %p183
      %s185 = ssub.s32 %s32, %s44
      %s186 = ssub.s32 %s33, %s40
      %s187 = sor.u32 %s185, %s186
      %p188 = scmp.eq.s32.totalorder %s187, 0
      %s190 = sadd.s32 %s189, 1
      %s191 = scalar_select %p188, %s189, %s190
      %p194 = pneg %p188
      %p195 = scmp.eq.s32.totalorder %s25, 1
      %p196 = por %p194, %p195
      %p197 = scmp.ne.s32.totalorder %s189, %s192
      %p198 = scmp.eq.s32.totalorder %s25, 0
      %p199 = por %p197, %p198
      %p200 = scmp.ne.s32.totalorder %s189, %s192
      %p201 = scmp.eq.s32.totalorder %s30, 1
      %p202 = por %p200, %p201
      %p203 = scmp.ne.s32.totalorder %s192, %s193
      %p204 = scmp.eq.s32.totalorder %s30, 0
      %p205 = por %p203, %p204
      %p206 = scmp.ne.s32.totalorder %s192, %s193
      %p207 = scmp.eq.s32.totalorder %s31, 1
      %p208 = por %p206, %p207
      %p210 = scmp.ne.s32.totalorder %s193, %s209
      %p211 = scmp.eq.s32.totalorder %s31, 0
      %p212 = por %p210, %p211
      %s213 = ssub.s32 %s32, %s44
      %s214 = ssub.s32 %s33, %s40
      %s215 = sor.u32 %s213, %s214
      %p216 = scmp.eq.s32.totalorder %s215, 0
      %s218 = sadd.s32 %s217, 1
      %s219 = scalar_select %p216, %s217, %s218
      %p222 = pneg %p216
      %p223 = scmp.eq.s32.totalorder %s25, 1
      %p224 = por %p222, %p223
      %p225 = scmp.ne.s32.totalorder %s217, %s220
      %p226 = scmp.eq.s32.totalorder %s25, 0
      %p227 = por %p225, %p226
      %p228 = scmp.ne.s32.totalorder %s217, %s220
      %p229 = scmp.eq.s32.totalorder %s30, 1
      %p230 = por %p228, %p229
      %p231 = scmp.ne.s32.totalorder %s220, %s221
      %p232 = scmp.eq.s32.totalorder %s30, 0
      %p233 = por %p231, %p232
      %p234 = scmp.ne.s32.totalorder %s220, %s221
      %p235 = scmp.eq.s32.totalorder %s31, 1
      %p236 = por %p234, %p235
      %p238 = scmp.ne.s32.totalorder %s221, %s237
      %p239 = scmp.eq.s32.totalorder %s31, 0
      %p240 = por %p238, %p239
      %p241 = scmp.le.s32.totalorder 1, %s25
      %p242 = scmp.lt.s32.totalorder %s25, 3
      %p243 = pnand %p241, %p242
      %p244 = pneg %p243
      // Predicated region
      $region9: #{tpu_custom_call.1} parent=5 // pred_check
        _
      $region10: #{tpu_custom_call.1} parent=5 // pred_check_branch
        %246 = sbr.rel (%p243) target = $region12
      $region11: #{tpu_custom_call.1} parent=5 // pred_region
        %s247 = ssub.s32 %s25, 1
        // Predicated region
        $region13: #{tpu_custom_call.1} parent=11 // pred_check
          %p248 = pneg %p86
        $region14: #{tpu_custom_call.1} parent=11 // pred_check_branch
          %250 = sbr.rel (%p248) target = $region16
        $region15: #{tpu_custom_call.1} parent=11 // pred_region
          %252 = vsyncadd [#allocation6], 0
          %s253 = sshll.u32 %s1, 4
          %s254 = int_to_ptr.hbm [resolvable:$true] %s253
          %s255 = sshll.u32 [#allocation5], 4
          %s256 = int_to_ptr.vmem [resolvable:$true] %s255
          %261 = dma.hbm_to_vmem [thread:$0]  %s254, 1024, %s256, [#allocation6], 64, 64, 4
        $region16: #{tpu_custom_call.1} parent=11 // pred_fallthru
          _
        // Predicated region
        $region17: #{tpu_custom_call.1} parent=11 // pred_check
          %p262 = pneg %p107
        $region18: #{tpu_custom_call.1} parent=11 // pred_check_branch
          %264 = sbr.rel (%p262) target = $region20
        $region19: #{tpu_custom_call.1} parent=11 // pred_region
          %266 = vsyncadd [#allocation6], 0
          %s267 = sshll.u32 %s2, 4
          %s268 = int_to_ptr.hbm [resolvable:$true] %s267
          %s269 = sshll.u32 [#allocation7], 4
          %s270 = int_to_ptr.vmem [resolvable:$true] %s269
          %275 = dma.hbm_to_vmem [thread:$0]  %s268, 1024, %s270, [#allocation6], 64, 64, 4
        $region20: #{tpu_custom_call.1} parent=11 // pred_fallthru
          _
        // Predicated region
        $region21: #{tpu_custom_call.1} parent=11 // pred_check
          %p276 = pneg %p128
        $region22: #{tpu_custom_call.1} parent=11 // pred_check_branch
          %278 = sbr.rel (%p276) target = $region24
        $region23: #{tpu_custom_call.1} parent=11 // pred_region
          %280 = vsyncadd [#allocation9], 0
          %s281 = sshll.u32 %s3, 4
          %s282 = int_to_ptr.hbm [resolvable:$true] %s281
          %s283 = sshll.u32 [#allocation8], 4
          %s284 = int_to_ptr.vmem [resolvable:$true] %s283
          %289 = dma.hbm_to_vmem [thread:$0]  %s282, 1024, %s284, [#allocation9], 64, 64, 4
        $region24: #{tpu_custom_call.1} parent=11 // pred_fallthru
          _
        // Predicated region
        $region25: #{tpu_custom_call.1} parent=11 // pred_check
          %p290 = pneg %p149
        $region26: #{tpu_custom_call.1} parent=11 // pred_check_branch
          %292 = sbr.rel (%p290) target = $region28
        $region27: #{tpu_custom_call.1} parent=11 // pred_region
          _
        $region28: #{tpu_custom_call.1} parent=11 // pred_fallthru
          _
      $region12: #{tpu_custom_call.1} parent=5 // pred_fallthru
        _
      %p293 = scmp.lt.s32.totalorder %s25, 2
      // Predicated region
      $region29: #{tpu_custom_call.1} parent=5 // pred_check
        %p294 = pneg %p293
      $region30: #{tpu_custom_call.1} parent=5 // pred_check_branch
        %296 = sbr.rel (%p294) target = $region32
      $region31: #{tpu_custom_call.1} parent=5 // pred_region
        // Predicated region
        $region33: #{tpu_custom_call.1} parent=31 // pred_check
          %p297 = pneg %p59
        $region34: #{tpu_custom_call.1} parent=31 // pred_check_branch
          %299 = sbr.rel (%p297) target = $region36
        $region35: #{tpu_custom_call.1} parent=31 // pred_region
          %s300 = sand.u32 %s49, 1
          %s301 = scalar_lea.sflag [#allocation3], %s300
          %s302 = sand.u32 %s49, 1
          %s303 = smul.addr %s302, 128
          %s304 = scalar_lea.vmem [#allocation2], %s303
          %s305 = smul.u32 32, %s33
          %307 = vsyncadd %s301, 0
          %s308 = smul.addr %s32, 32
          %s309 = sadd.s32 %s305, %s308
          %s310 = smul.addr %s309, 4
          %s311 = scalar_lea.hbm %s0, %s310
          %s312 = sshll.u32 %s311, 4
          %s313 = int_to_ptr.hbm [resolvable:$true] %s312
          %s314 = sshll.u32 %s304, 4
          %s315 = int_to_ptr.vmem [resolvable:$true] %s314
          %320 = dma.hbm_to_vmem [thread:$0]  %s313, 2048, %s315, %s301, 64, 64, 4
        $region36: #{tpu_custom_call.1} parent=31 // pred_fallthru
          _
      $region32: #{tpu_custom_call.1} parent=5 // pred_fallthru
        _
      %p321 = scmp.le.s32.totalorder 1, %s25
      %p322 = scmp.lt.s32.totalorder %s25, 3
      %p323 = pnand %p321, %p322
      %p324 = pneg %p323
      // Predicated region
      $region37: #{tpu_custom_call.1} parent=5 // pred_check
        _
      $region38: #{tpu_custom_call.1} parent=5 // pred_check_branch
        %326 = sbr.rel (%p323) target = $region40
      $region39: #{tpu_custom_call.1} parent=5 // pred_region
        %s327 = ssub.s32 %s25, 1
        %s328 = sand.u32 %s52, 1
        %s329 = scalar_lea.sflag [#allocation3], %s328
        %s330 = sand.u32 %s52, 1
        %s331 = smul.addr %s330, 128
        %s332 = scalar_lea.vmem [#allocation2], %s331
        // Predicated region
        $region41: #{tpu_custom_call.1} parent=39 // pred_check
          %p333 = pneg %p65
        $region42: #{tpu_custom_call.1} parent=39 // pred_check_branch
          %335 = sbr.rel (%p333) target = $region44
        $region43: #{tpu_custom_call.1} parent=39 // pred_region
          %337 = dma.done %s329, 2048
        $region44: #{tpu_custom_call.1} parent=39 // pred_fallthru
          _
        // Predicated region
        $region45: #{tpu_custom_call.1} parent=39 // pred_check
          %p338 = pneg %p86
        $region46: #{tpu_custom_call.1} parent=39 // pred_check_branch
          %340 = sbr.rel (%p338) target = $region48
        $region47: #{tpu_custom_call.1} parent=39 // pred_region
          %342 = dma.done [#allocation6], 1024
        $region48: #{tpu_custom_call.1} parent=39 // pred_fallthru
          _
        // Predicated region
        $region49: #{tpu_custom_call.1} parent=39 // pred_check
          %p343 = pneg %p107
        $region50: #{tpu_custom_call.1} parent=39 // pred_check_branch
          %345 = sbr.rel (%p343) target = $region52
        $region51: #{tpu_custom_call.1} parent=39 // pred_region
          %347 = dma.done [#allocation6], 1024
        $region52: #{tpu_custom_call.1} parent=39 // pred_fallthru
          _
        // Predicated region
        $region53: #{tpu_custom_call.1} parent=39 // pred_check
          %p348 = pneg %p128
        $region54: #{tpu_custom_call.1} parent=39 // pred_check_branch
          %350 = sbr.rel (%p348) target = $region56
        $region55: #{tpu_custom_call.1} parent=39 // pred_region
          %352 = dma.done [#allocation9], 1024
        $region56: #{tpu_custom_call.1} parent=39 // pred_fallthru
          _
        %s353 = sand.u32 %s52, 1
        %s354 = scalar_lea.sflag [#allocation3], %s353
        %s355 = sand.u32 %s52, 1
        %s356 = smul.addr %s355, 128
        %s357 = scalar_lea.vmem [#allocation2], %s356
        %p358 = pneg %p65
        %p359 = pneg %p62
        %p360 = pneg %p86
        %p361 = pneg %p83
        %p362 = pneg %p107
        %p363 = pneg %p104
        %p364 = pneg %p128
        %p365 = pneg %p125
        %p366 = pneg %p149
        %p367 = pneg %p146
        %p368 = pneg %p177
        %p369 = pneg %p174
        %s370 = sand.u32 %s164, 1
        %s371 = scalar_lea.sflag [#allocation4], %s370
        %s372 = sand.u32 %s164, 1
        %s373 = smul.addr %s372, 128
        %s374 = scalar_lea.vmem [#allocation10], %s373
        %p375 = pneg %p205
        %p376 = pneg %p202
        %s377 = sand.u32 %s30, 1
        %s378 = scalar_lea.sflag [#allocation12], %s377
        %s379 = sand.u32 %s192, 1
        %s380 = smul.addr %s379, 128
        %s381 = scalar_lea.vmem [#allocation11], %s380
        %p382 = pneg %p233
        %p383 = pneg %p230
        %s384 = sand.u32 %s30, 1
        %s385 = scalar_lea.sflag [#allocation12], %s384
        %s386 = sand.u32 %s220, 1
        %s387 = smul.addr %s386, 128
        %s388 = scalar_lea.vmem [#allocation13], %s387
        %s389 = smul.u32 32, %s35
        %s390 = smul.u32 32, %s35
        %s391 = smul.u32 32, %s35
        %s392 = smul.u32 32, %s35
        %v393 = vld [vmem:[%s332] sm:$0xf]
        %v394 = vld [vmem:[%s332 + $0x4] sm:$0xf]
        %v395 = vld [vmem:[%s332 + $0x8] sm:$0xf]
        %v396 = vld [vmem:[%s332 + $0xc] sm:$0xf]
        %v397 = vld [vmem:[%s332 + $0x10] sm:$0xf]
        %v398 = vld [vmem:[%s332 + $0x14] sm:$0xf]
        %v399 = vld [vmem:[%s332 + $0x18] sm:$0xf]
        %v400 = vld [vmem:[%s332 + $0x1c] sm:$0xf]
        %v401 = vld [vmem:[%s332 + $0x20] sm:$0xf]
        %v402 = vld [vmem:[%s332 + $0x24] sm:$0xf]
        %v403 = vld [vmem:[%s332 + $0x28] sm:$0xf]
        %v404 = vld [vmem:[%s332 + $0x2c] sm:$0xf]
        %v405 = vld [vmem:[%s332 + $0x30] sm:$0xf]
        %v406 = vld [vmem:[%s332 + $0x34] sm:$0xf]
        %v407 = vld [vmem:[%s332 + $0x38] sm:$0xf]
        %v408 = vld [vmem:[%s332 + $0x3c] sm:$0xf]
        %v409 = vld [vmem:[%s332 + $0x40] sm:$0xf]
        %v410 = vld [vmem:[%s332 + $0x44] sm:$0xf]
        %v411 = vld [vmem:[%s332 + $0x48] sm:$0xf]
        %v412 = vld [vmem:[%s332 + $0x4c] sm:$0xf]
        %v413 = vld [vmem:[%s332 + $0x50] sm:$0xf]
        %v414 = vld [vmem:[%s332 + $0x54] sm:$0xf]
        %v415 = vld [vmem:[%s332 + $0x58] sm:$0xf]
        %v416 = vld [vmem:[%s332 + $0x5c] sm:$0xf]
        %v417 = vld [vmem:[%s332 + $0x60] sm:$0xf]
        %v418 = vld [vmem:[%s332 + $0x64] sm:$0xf]
        %v419 = vld [vmem:[%s332 + $0x68] sm:$0xf]
        %v420 = vld [vmem:[%s332 + $0x6c] sm:$0xf]
        %v421 = vld [vmem:[%s332 + $0x70] sm:$0xf]
        %v422 = vld [vmem:[%s332 + $0x74] sm:$0xf]
        %v423 = vld [vmem:[%s332 + $0x78] sm:$0xf]
        %v424 = vld [vmem:[%s332 + $0x7c] sm:$0xf]
        %v425 = vld [vmem:[#allocation5] sm:$0xf]
        %v426 = vld [vmem:[#allocation5 + $0x4] sm:$0xf]
        %v427 = vld [vmem:[#allocation5 + $0x8] sm:$0xf]
        %v428 = vld [vmem:[#allocation5 + $0xc] sm:$0xf]
        %v429 = vld [vmem:[#allocation5 + $0x10] sm:$0xf]
        %v430 = vld [vmem:[#allocation5 + $0x14] sm:$0xf]
        %v431 = vld [vmem:[#allocation5 + $0x18] sm:$0xf]
        %v432 = vld [vmem:[#allocation5 + $0x1c] sm:$0xf]
        %v433 = vld [vmem:[#allocation5 + $0x20] sm:$0xf]
        %v434 = vld [vmem:[#allocation5 + $0x24] sm:$0xf]
        %v435 = vld [vmem:[#allocation5 + $0x28] sm:$0xf]
        %v436 = vld [vmem:[#allocation5 + $0x2c] sm:$0xf]
        %v437 = vld [vmem:[#allocation5 + $0x30] sm:$0xf]
        %v438 = vld [vmem:[#allocation5 + $0x34] sm:$0xf]
        %v439 = vld [vmem:[#allocation5 + $0x38] sm:$0xf]
        %v440 = vld [vmem:[#allocation5 + $0x3c] sm:$0xf]
        %v441 = vld [vmem:[%s4] sm:$0x1]
        %v443 = vperm.slane %v441, 0
        %v477 = vunpack.c.l.b16 %v393
        %v478 = vunpack.c.l.b16 %v394
        %v479 = vunpack.c.l.b16 %v395
        %v480 = vunpack.c.l.b16 %v396
        %v481 = vunpack.c.l.b16 %v397
        %v482 = vunpack.c.l.b16 %v398
        %v483 = vunpack.c.l.b16 %v399
        %v484 = vunpack.c.l.b16 %v400
        %v485 = vunpack.c.l.b16 %v401
        %v486 = vunpack.c.l.b16 %v402
        %v487 = vunpack.c.l.b16 %v403
        %v488 = vunpack.c.l.b16 %v404
        %v489 = vunpack.c.l.b16 %v405
        %v490 = vunpack.c.l.b16 %v406
        %v491 = vunpack.c.l.b16 %v407
        %v492 = vunpack.c.l.b16 %v408
        %v493 = vunpack.c.l.b16 %v409
        %v494 = vunpack.c.l.b16 %v410
        %v495 = vunpack.c.l.b16 %v411
        %v496 = vunpack.c.l.b16 %v412
        %v497 = vunpack.c.l.b16 %v413
        %v498 = vunpack.c.l.b16 %v414
        %v499 = vunpack.c.l.b16 %v415
        %v500 = vunpack.c.l.b16 %v416
        %v501 = vunpack.c.l.b16 %v417
        %v502 = vunpack.c.l.b16 %v418
        %v503 = vunpack.c.l.b16 %v419
        %v504 = vunpack.c.l.b16 %v420
        %v505 = vunpack.c.l.b16 %v421
        %v506 = vunpack.c.l.b16 %v422
        %v507 = vunpack.c.l.b16 %v423
        %v508 = vunpack.c.l.b16 %v424
        %v509 = vpack.c.b16 %v478, %v477
        %v510 = vpack.c.b16 %v480, %v479
        %v511 = vpack.c.b16 %v482, %v481
        %v512 = vpack.c.b16 %v484, %v483
        %v513 = vpack.c.b16 %v486, %v485
        %v514 = vpack.c.b16 %v488, %v487
        %v515 = vpack.c.b16 %v490, %v489
        %v516 = vpack.c.b16 %v492, %v491
        %v517 = vpack.c.b16 %v494, %v493
        %v518 = vpack.c.b16 %v496, %v495
        %v519 = vpack.c.b16 %v498, %v497
        %v520 = vpack.c.b16 %v500, %v499
        %v521 = vpack.c.b16 %v502, %v501
        %v522 = vpack.c.b16 %v504, %v503
        %v523 = vpack.c.b16 %v506, %v505
        %v524 = vpack.c.b16 %v508, %v507
        %v557 = vunpack.c.l.b16 %v425
        %v558 = vunpack.c.l.b16 %v426
        %v559 = vunpack.c.l.b16 %v427
        %v560 = vunpack.c.l.b16 %v428
        %v561 = vunpack.c.l.b16 %v429
        %v562 = vunpack.c.l.b16 %v430
        %v563 = vunpack.c.l.b16 %v431
        %v564 = vunpack.c.l.b16 %v432
        %v565 = vunpack.c.l.b16 %v433
        %v566 = vunpack.c.l.b16 %v434
        %v567 = vunpack.c.l.b16 %v435
        %v568 = vunpack.c.l.b16 %v436
        %v569 = vunpack.c.l.b16 %v437
        %v570 = vunpack.c.l.b16 %v438
        %v571 = vunpack.c.l.b16 %v439
        %v572 = vunpack.c.l.b16 %v440
        %v573 = vpack.c.b16 %v558, %v557
        %v574 = vpack.c.b16 %v560, %v559
        %v575 = vpack.c.b16 %v562, %v561
        %v576 = vpack.c.b16 %v564, %v563
        %v577 = vpack.c.b16 %v566, %v565
        %v578 = vpack.c.b16 %v568, %v567
        %v579 = vpack.c.b16 %v570, %v569
        %v580 = vpack.c.b16 %v572, %v571
        %589 = vmatpush.bf16.msra.mxu0 %v580
        %590 = vmatpush.bf16.msra.mxu0 %v579
        %591 = vmatpush.bf16.msra.mxu0 %v578
        %592 = vmatpush.bf16.msra.mxu0 %v577
        %593 = vmatpush.bf16.msra.mxu0 %v576
        %594 = vmatpush.bf16.msra.mxu0 %v575
        %595 = vmatpush.bf16.msra.mxu0 %v574
        %596 = vmatpush.bf16.msra.mxu0 %v573
        %597 = vmatmul.bf16.gmra.mxu0 %v509
        %v598 = vpop.f32.mrf.mxu0
        %v599 = vadd.f32 %v443, %v598
        %v600 = vpop.f32.mrf.mxu0
        %v601 = vadd.f32 %v443, %v600
        %602 = vmatmul.bf16.gmra.mxu0 %v510
        %v603 = vpop.f32.mrf.mxu0
        %v604 = vadd.f32 %v443, %v603
        %v605 = vpop.f32.mrf.mxu0
        %v606 = vadd.f32 %v443, %v605
        %607 = vmatmul.bf16.gmra.mxu0 %v511
        %v608 = vpop.f32.mrf.mxu0
        %v609 = vadd.f32 %v443, %v608
        %v610 = vpop.f32.mrf.mxu0
        %v611 = vadd.f32 %v443, %v610
        %612 = vmatmul.bf16.gmra.mxu0 %v512
        %v613 = vpop.f32.mrf.mxu0
        %v614 = vadd.f32 %v443, %v613
        %v615 = vpop.f32.mrf.mxu0
        %v616 = vadd.f32 %v443, %v615
        %617 = vmatmul.bf16.gmra.mxu0 %v513
        %v618 = vpop.f32.mrf.mxu0
        %v619 = vadd.f32 %v443, %v618
        %v620 = vpop.f32.mrf.mxu0
        %v621 = vadd.f32 %v443, %v620
        %622 = vmatmul.bf16.gmra.mxu0 %v514
        %v623 = vpop.f32.mrf.mxu0
        %v624 = vadd.f32 %v443, %v623
        %v625 = vpop.f32.mrf.mxu0
        %v626 = vadd.f32 %v443, %v625
        %627 = vmatmul.bf16.gmra.mxu0 %v515
        %v628 = vpop.f32.mrf.mxu0
        %v629 = vadd.f32 %v443, %v628
        %v630 = vpop.f32.mrf.mxu0
        %v631 = vadd.f32 %v443, %v630
        %632 = vmatmul.bf16.gmra.mxu0 %v516
        %v633 = vpop.f32.mrf.mxu0
        %v634 = vadd.f32 %v443, %v633
        %v635 = vpop.f32.mrf.mxu0
        %v636 = vadd.f32 %v443, %v635
        %637 = vmatmul.bf16.gmra.mxu0 %v517
        %v638 = vpop.f32.mrf.mxu0
        %v639 = vadd.f32 %v443, %v638
        %v640 = vpop.f32.mrf.mxu0
        %v641 = vadd.f32 %v443, %v640
        %642 = vmatmul.bf16.gmra.mxu0 %v518
        %v643 = vpop.f32.mrf.mxu0
        %v644 = vadd.f32 %v443, %v643
        %v645 = vpop.f32.mrf.mxu0
        %v646 = vadd.f32 %v443, %v645
        %647 = vmatmul.bf16.gmra.mxu0 %v519
        %v648 = vpop.f32.mrf.mxu0
        %v649 = vadd.f32 %v443, %v648
        %v650 = vpop.f32.mrf.mxu0
        %v651 = vadd.f32 %v443, %v650
        %652 = vmatmul.bf16.gmra.mxu0 %v520
        %v653 = vpop.f32.mrf.mxu0
        %v654 = vadd.f32 %v443, %v653
        %v655 = vpop.f32.mrf.mxu0
        %v656 = vadd.f32 %v443, %v655
        %657 = vmatmul.bf16.gmra.mxu0 %v521
        %v658 = vpop.f32.mrf.mxu0
        %v659 = vadd.f32 %v443, %v658
        %v660 = vpop.f32.mrf.mxu0
        %v661 = vadd.f32 %v443, %v660
        %662 = vmatmul.bf16.gmra.mxu0 %v522
        %v663 = vpop.f32.mrf.mxu0
        %v664 = vadd.f32 %v443, %v663
        %v665 = vpop.f32.mrf.mxu0
        %v666 = vadd.f32 %v443, %v665
        %667 = vmatmul.bf16.gmra.mxu0 %v523
        %v668 = vpop.f32.mrf.mxu0
        %v669 = vadd.f32 %v443, %v668
        %v670 = vpop.f32.mrf.mxu0
        %v671 = vadd.f32 %v443, %v670
        %672 = vmatmul.bf16.gmra.mxu0 %v524
        %v673 = vpop.f32.mrf.mxu0
        %v674 = vadd.f32 %v443, %v673
        %v675 = vpop.f32.mrf.mxu0
        %v676 = vadd.f32 %v443, %v675
        %677 = vdwg.mxu0
        %v678 = vpack.c.bf16 %v599, %v599
        %v679 = vpack.c.bf16 %v601, %v601
        %v680 = vpack.c.bf16 %v604, %v604
        %v681 = vpack.c.bf16 %v606, %v606
        %v682 = vpack.c.bf16 %v609, %v609
        %v683 = vpack.c.bf16 %v611, %v611
        %v684 = vpack.c.bf16 %v614, %v614
        %v685 = vpack.c.bf16 %v616, %v616
        %v686 = vpack.c.bf16 %v619, %v619
        %v687 = vpack.c.bf16 %v621, %v621
        %v688 = vpack.c.bf16 %v624, %v624
        %v689 = vpack.c.bf16 %v626, %v626
        %v690 = vpack.c.bf16 %v629, %v629
        %v691 = vpack.c.bf16 %v631, %v631
        %v692 = vpack.c.bf16 %v634, %v634
        %v693 = vpack.c.bf16 %v636, %v636
        %v694 = vpack.c.bf16 %v639, %v639
        %v695 = vpack.c.bf16 %v641, %v641
        %v696 = vpack.c.bf16 %v644, %v644
        %v697 = vpack.c.bf16 %v646, %v646
        %v698 = vpack.c.bf16 %v649, %v649
        %v699 = vpack.c.bf16 %v651, %v651
        %v700 = vpack.c.bf16 %v654, %v654
        %v701 = vpack.c.bf16 %v656, %v656
        %v702 = vpack.c.bf16 %v659, %v659
        %v703 = vpack.c.bf16 %v661, %v661
        %v704 = vpack.c.bf16 %v664, %v664
        %v705 = vpack.c.bf16 %v666, %v666
        %v706 = vpack.c.bf16 %v669, %v669
        %v707 = vpack.c.bf16 %v671, %v671
        %v708 = vpack.c.bf16 %v674, %v674
        %v709 = vpack.c.bf16 %v676, %v676
        %710 = vst [vmem:[%s374] sm:$0xf] %v678
        %711 = vst [vmem:[%s374 + $0x4] sm:$0xf] %v679
        %712 = vst [vmem:[%s374 + $0x8] sm:$0xf] %v680
        %713 = vst [vmem:[%s374 + $0xc] sm:$0xf] %v681
        %714 = vst [vmem:[%s374 + $0x10] sm:$0xf] %v682
        %715 = vst [vmem:[%s374 + $0x14] sm:$0xf] %v683
        %716 = vst [vmem:[%s374 + $0x18] sm:$0xf] %v684
        %717 = vst [vmem:[%s374 + $0x1c] sm:$0xf] %v685
        %718 = vst [vmem:[%s374 + $0x20] sm:$0xf] %v686
        %719 = vst [vmem:[%s374 + $0x24] sm:$0xf] %v687
        %720 = vst [vmem:[%s374 + $0x28] sm:$0xf] %v688
        %721 = vst [vmem:[%s374 + $0x2c] sm:$0xf] %v689
        %722 = vst [vmem:[%s374 + $0x30] sm:$0xf] %v690
        %723 = vst [vmem:[%s374 + $0x34] sm:$0xf] %v691
        %724 = vst [vmem:[%s374 + $0x38] sm:$0xf] %v692
        %725 = vst [vmem:[%s374 + $0x3c] sm:$0xf] %v693
        %726 = vst [vmem:[%s374 + $0x40] sm:$0xf] %v694
        %727 = vst [vmem:[%s374 + $0x44] sm:$0xf] %v695
        %728 = vst [vmem:[%s374 + $0x48] sm:$0xf] %v696
        %729 = vst [vmem:[%s374 + $0x4c] sm:$0xf] %v697
        %730 = vst [vmem:[%s374 + $0x50] sm:$0xf] %v698
        %731 = vst [vmem:[%s374 + $0x54] sm:$0xf] %v699
        %732 = vst [vmem:[%s374 + $0x58] sm:$0xf] %v700
        %733 = vst [vmem:[%s374 + $0x5c] sm:$0xf] %v701
        %734 = vst [vmem:[%s374 + $0x60] sm:$0xf] %v702
        %735 = vst [vmem:[%s374 + $0x64] sm:$0xf] %v703
        %736 = vst [vmem:[%s374 + $0x68] sm:$0xf] %v704
        %737 = vst [vmem:[%s374 + $0x6c] sm:$0xf] %v705
        %738 = vst [vmem:[%s374 + $0x70] sm:$0xf] %v706
        %739 = vst [vmem:[%s374 + $0x74] sm:$0xf] %v707
        %740 = vst [vmem:[%s374 + $0x78] sm:$0xf] %v708
        %741 = vst [vmem:[%s374 + $0x7c] sm:$0xf] %v709
        %v742 = vld [vmem:[#allocation7] sm:$0xf]
        %v743 = vld [vmem:[#allocation7 + $0x4] sm:$0xf]
        %v744 = vld [vmem:[#allocation7 + $0x8] sm:$0xf]
        %v745 = vld [vmem:[#allocation7 + $0xc] sm:$0xf]
        %v746 = vld [vmem:[#allocation7 + $0x10] sm:$0xf]
        %v747 = vld [vmem:[#allocation7 + $0x14] sm:$0xf]
        %v748 = vld [vmem:[#allocation7 + $0x18] sm:$0xf]
        %v749 = vld [vmem:[#allocation7 + $0x1c] sm:$0xf]
        %v750 = vld [vmem:[#allocation7 + $0x20] sm:$0xf]
        %v751 = vld [vmem:[#allocation7 + $0x24] sm:$0xf]
        %v752 = vld [vmem:[#allocation7 + $0x28] sm:$0xf]
        %v753 = vld [vmem:[#allocation7 + $0x2c] sm:$0xf]
        %v754 = vld [vmem:[#allocation7 + $0x30] sm:$0xf]
        %v755 = vld [vmem:[#allocation7 + $0x34] sm:$0xf]
        %v756 = vld [vmem:[#allocation7 + $0x38] sm:$0xf]
        %v757 = vld [vmem:[#allocation7 + $0x3c] sm:$0xf]
        %v774 = vunpack.c.l.b16 %v742
        %v775 = vunpack.c.l.b16 %v743
        %v776 = vunpack.c.l.b16 %v744
        %v777 = vunpack.c.l.b16 %v745
        %v778 = vunpack.c.l.b16 %v746
        %v779 = vunpack.c.l.b16 %v747
        %v780 = vunpack.c.l.b16 %v748
        %v781 = vunpack.c.l.b16 %v749
        %v782 = vunpack.c.l.b16 %v750
        %v783 = vunpack.c.l.b16 %v751
        %v784 = vunpack.c.l.b16 %v752
        %v785 = vunpack.c.l.b16 %v753
        %v786 = vunpack.c.l.b16 %v754
        %v787 = vunpack.c.l.b16 %v755
        %v788 = vunpack.c.l.b16 %v756
        %v789 = vunpack.c.l.b16 %v757
        %v790 = vpack.c.b16 %v775, %v774
        %v791 = vpack.c.b16 %v777, %v776
        %v792 = vpack.c.b16 %v779, %v778
        %v793 = vpack.c.b16 %v781, %v780
        %v794 = vpack.c.b16 %v783, %v782
        %v795 = vpack.c.b16 %v785, %v784
        %v796 = vpack.c.b16 %v787, %v786
        %v797 = vpack.c.b16 %v789, %v788
        %806 = vmatpush.bf16.msra.mxu0 %v797
        %807 = vmatpush.bf16.msra.mxu0 %v796
        %808 = vmatpush.bf16.msra.mxu0 %v795
        %809 = vmatpush.bf16.msra.mxu0 %v794
        %810 = vmatpush.bf16.msra.mxu0 %v793
        %811 = vmatpush.bf16.msra.mxu0 %v792
        %812 = vmatpush.bf16.msra.mxu0 %v791
        %813 = vmatpush.bf16.msra.mxu0 %v790
        %814 = vmatmul.bf16.gmra.mxu0 %v509
        %v815 = vpop.f32.mrf.mxu0
        %v816 = vadd.f32 0.0, %v815
        %v817 = vpop.f32.mrf.mxu0
        %v818 = vadd.f32 0.0, %v817
        %819 = vmatmul.bf16.gmra.mxu0 %v510
        %v820 = vpop.f32.mrf.mxu0
        %v821 = vadd.f32 0.0, %v820
        %v822 = vpop.f32.mrf.mxu0
        %v823 = vadd.f32 0.0, %v822
        %824 = vmatmul.bf16.gmra.mxu0 %v511
        %v825 = vpop.f32.mrf.mxu0
        %v826 = vadd.f32 0.0, %v825
        %v827 = vpop.f32.mrf.mxu0
        %v828 = vadd.f32 0.0, %v827
        %829 = vmatmul.bf16.gmra.mxu0 %v512
        %v830 = vpop.f32.mrf.mxu0
        %v831 = vadd.f32 0.0, %v830
        %v832 = vpop.f32.mrf.mxu0
        %v833 = vadd.f32 0.0, %v832
        %834 = vmatmul.bf16.gmra.mxu0 %v513
        %v835 = vpop.f32.mrf.mxu0
        %v836 = vadd.f32 0.0, %v835
        %v837 = vpop.f32.mrf.mxu0
        %v838 = vadd.f32 0.0, %v837
        %839 = vmatmul.bf16.gmra.mxu0 %v514
        %v840 = vpop.f32.mrf.mxu0
        %v841 = vadd.f32 0.0, %v840
        %v842 = vpop.f32.mrf.mxu0
        %v843 = vadd.f32 0.0, %v842
        %844 = vmatmul.bf16.gmra.mxu0 %v515
        %v845 = vpop.f32.mrf.mxu0
        %v846 = vadd.f32 0.0, %v845
        %v847 = vpop.f32.mrf.mxu0
        %v848 = vadd.f32 0.0, %v847
        %849 = vmatmul.bf16.gmra.mxu0 %v516
        %v850 = vpop.f32.mrf.mxu0
        %v851 = vadd.f32 0.0, %v850
        %v852 = vpop.f32.mrf.mxu0
        %v853 = vadd.f32 0.0, %v852
        %854 = vmatmul.bf16.gmra.mxu0 %v517
        %v855 = vpop.f32.mrf.mxu0
        %v856 = vadd.f32 0.0, %v855
        %v857 = vpop.f32.mrf.mxu0
        %v858 = vadd.f32 0.0, %v857
        %859 = vmatmul.bf16.gmra.mxu0 %v518
        %v860 = vpop.f32.mrf.mxu0
        %v861 = vadd.f32 0.0, %v860
        %v862 = vpop.f32.mrf.mxu0
        %v863 = vadd.f32 0.0, %v862
        %864 = vmatmul.bf16.gmra.mxu0 %v519
        %v865 = vpop.f32.mrf.mxu0
        %v866 = vadd.f32 0.0, %v865
        %v867 = vpop.f32.mrf.mxu0
        %v868 = vadd.f32 0.0, %v867
        %869 = vmatmul.bf16.gmra.mxu0 %v520
        %v870 = vpop.f32.mrf.mxu0
        %v871 = vadd.f32 0.0, %v870
        %v872 = vpop.f32.mrf.mxu0
        %v873 = vadd.f32 0.0, %v872
        %874 = vmatmul.bf16.gmra.mxu0 %v521
        %v875 = vpop.f32.mrf.mxu0
        %v876 = vadd.f32 0.0, %v875
        %v877 = vpop.f32.mrf.mxu0
        %v878 = vadd.f32 0.0, %v877
        %879 = vmatmul.bf16.gmra.mxu0 %v522
        %v880 = vpop.f32.mrf.mxu0
        %v881 = vadd.f32 0.0, %v880
        %v882 = vpop.f32.mrf.mxu0
        %v883 = vadd.f32 0.0, %v882
        %884 = vmatmul.bf16.gmra.mxu0 %v523
        %v885 = vpop.f32.mrf.mxu0
        %v886 = vadd.f32 0.0, %v885
        %v887 = vpop.f32.mrf.mxu0
        %v888 = vadd.f32 0.0, %v887
        %889 = vmatmul.bf16.gmra.mxu0 %v524
        %v890 = vpop.f32.mrf.mxu0
        %v891 = vadd.f32 0.0, %v890
        %v892 = vpop.f32.mrf.mxu0
        %v893 = vadd.f32 0.0, %v892
        %894 = vdwg.mxu0
        %v895 = vpack.c.bf16 %v816, %v816
        %v896 = vpack.c.bf16 %v818, %v818
        %v897 = vpack.c.bf16 %v821, %v821
        %v898 = vpack.c.bf16 %v823, %v823
        %v899 = vpack.c.bf16 %v826, %v826
        %v900 = vpack.c.bf16 %v828, %v828
        %v901 = vpack.c.bf16 %v831, %v831
        %v902 = vpack.c.bf16 %v833, %v833
        %v903 = vpack.c.bf16 %v836, %v836
        %v904 = vpack.c.bf16 %v838, %v838
        %v905 = vpack.c.bf16 %v841, %v841
        %v906 = vpack.c.bf16 %v843, %v843
        %v907 = vpack.c.bf16 %v846, %v846
        %v908 = vpack.c.bf16 %v848, %v848
        %v909 = vpack.c.bf16 %v851, %v851
        %v910 = vpack.c.bf16 %v853, %v853
        %v911 = vpack.c.bf16 %v856, %v856
        %v912 = vpack.c.bf16 %v858, %v858
        %v913 = vpack.c.bf16 %v861, %v861
        %v914 = vpack.c.bf16 %v863, %v863
        %v915 = vpack.c.bf16 %v866, %v866
        %v916 = vpack.c.bf16 %v868, %v868
        %v917 = vpack.c.bf16 %v871, %v871
        %v918 = vpack.c.bf16 %v873, %v873
        %v919 = vpack.c.bf16 %v876, %v876
        %v920 = vpack.c.bf16 %v878, %v878
        %v921 = vpack.c.bf16 %v881, %v881
        %v922 = vpack.c.bf16 %v883, %v883
        %v923 = vpack.c.bf16 %v886, %v886
        %v924 = vpack.c.bf16 %v888, %v888
        %v925 = vpack.c.bf16 %v891, %v891
        %v926 = vpack.c.bf16 %v893, %v893
        %927 = vst [vmem:[%s381] sm:$0xf] %v895
        %928 = vst [vmem:[%s381 + $0x4] sm:$0xf] %v896
        %929 = vst [vmem:[%s381 + $0x8] sm:$0xf] %v897
        %930 = vst [vmem:[%s381 + $0xc] sm:$0xf] %v898
        %931 = vst [vmem:[%s381 + $0x10] sm:$0xf] %v899
        %932 = vst [vmem:[%s381 + $0x14] sm:$0xf] %v900
        %933 = vst [vmem:[%s381 + $0x18] sm:$0xf] %v901
        %934 = vst [vmem:[%s381 + $0x1c] sm:$0xf] %v902
        %935 = vst [vmem:[%s381 + $0x20] sm:$0xf] %v903
        %936 = vst [vmem:[%s381 + $0x24] sm:$0xf] %v904
        %937 = vst [vmem:[%s381 + $0x28] sm:$0xf] %v905
        %938 = vst [vmem:[%s381 + $0x2c] sm:$0xf] %v906
        %939 = vst [vmem:[%s381 + $0x30] sm:$0xf] %v907
        %940 = vst [vmem:[%s381 + $0x34] sm:$0xf] %v908
        %941 = vst [vmem:[%s381 + $0x38] sm:$0xf] %v909
        %942 = vst [vmem:[%s381 + $0x3c] sm:$0xf] %v910
        %943 = vst [vmem:[%s381 + $0x40] sm:$0xf] %v911
        %944 = vst [vmem:[%s381 + $0x44] sm:$0xf] %v912
        %945 = vst [vmem:[%s381 + $0x48] sm:$0xf] %v913
        %946 = vst [vmem:[%s381 + $0x4c] sm:$0xf] %v914
        %947 = vst [vmem:[%s381 + $0x50] sm:$0xf] %v915
        %948 = vst [vmem:[%s381 + $0x54] sm:$0xf] %v916
        %949 = vst [vmem:[%s381 + $0x58] sm:$0xf] %v917
        %950 = vst [vmem:[%s381 + $0x5c] sm:$0xf] %v918
        %951 = vst [vmem:[%s381 + $0x60] sm:$0xf] %v919
        %952 = vst [vmem:[%s381 + $0x64] sm:$0xf] %v920
        %953 = vst [vmem:[%s381 + $0x68] sm:$0xf] %v921
        %954 = vst [vmem:[%s381 + $0x6c] sm:$0xf] %v922
        %955 = vst [vmem:[%s381 + $0x70] sm:$0xf] %v923
        %956 = vst [vmem:[%s381 + $0x74] sm:$0xf] %v924
        %957 = vst [vmem:[%s381 + $0x78] sm:$0xf] %v925
        %958 = vst [vmem:[%s381 + $0x7c] sm:$0xf] %v926
        %v959 = vld [vmem:[#allocation8] sm:$0xf]
        %v960 = vld [vmem:[#allocation8 + $0x4] sm:$0xf]
        %v961 = vld [vmem:[#allocation8 + $0x8] sm:$0xf]
        %v962 = vld [vmem:[#allocation8 + $0xc] sm:$0xf]
        %v963 = vld [vmem:[#allocation8 + $0x10] sm:$0xf]
        %v964 = vld [vmem:[#allocation8 + $0x14] sm:$0xf]
        %v965 = vld [vmem:[#allocation8 + $0x18] sm:$0xf]
        %v966 = vld [vmem:[#allocation8 + $0x1c] sm:$0xf]
        %v967 = vld [vmem:[#allocation8 + $0x20] sm:$0xf]
        %v968 = vld [vmem:[#allocation8 + $0x24] sm:$0xf]
        %v969 = vld [vmem:[#allocation8 + $0x28] sm:$0xf]
        %v970 = vld [vmem:[#allocation8 + $0x2c] sm:$0xf]
        %v971 = vld [vmem:[#allocation8 + $0x30] sm:$0xf]
        %v972 = vld [vmem:[#allocation8 + $0x34] sm:$0xf]
        %v973 = vld [vmem:[#allocation8 + $0x38] sm:$0xf]
        %v974 = vld [vmem:[#allocation8 + $0x3c] sm:$0xf]
        %v991 = vunpack.c.l.b16 %v959
        %v992 = vunpack.c.l.b16 %v960
        %v993 = vunpack.c.l.b16 %v961
        %v994 = vunpack.c.l.b16 %v962
        %v995 = vunpack.c.l.b16 %v963
        %v996 = vunpack.c.l.b16 %v964
        %v997 = vunpack.c.l.b16 %v965
        %v998 = vunpack.c.l.b16 %v966
        %v999 = vunpack.c.l.b16 %v967
        %v1000 = vunpack.c.l.b16 %v968
        %v1001 = vunpack.c.l.b16 %v969
        %v1002 = vunpack.c.l.b16 %v970
        %v1003 = vunpack.c.l.b16 %v971
        %v1004 = vunpack.c.l.b16 %v972
        %v1005 = vunpack.c.l.b16 %v973
        %v1006 = vunpack.c.l.b16 %v974
        %v1007 = vpack.c.b16 %v992, %v991
        %v1008 = vpack.c.b16 %v994, %v993
        %v1009 = vpack.c.b16 %v996, %v995
        %v1010 = vpack.c.b16 %v998, %v997
        %v1011 = vpack.c.b16 %v1000, %v999
        %v1012 = vpack.c.b16 %v1002, %v1001
        %v1013 = vpack.c.b16 %v1004, %v1003
        %v1014 = vpack.c.b16 %v1006, %v1005
        %1023 = vmatpush.bf16.msra.mxu0 %v1014
        %1024 = vmatpush.bf16.msra.mxu0 %v1013
        %1025 = vmatpush.bf16.msra.mxu0 %v1012
        %1026 = vmatpush.bf16.msra.mxu0 %v1011
        %1027 = vmatpush.bf16.msra.mxu0 %v1010
        %1028 = vmatpush.bf16.msra.mxu0 %v1009
        %1029 = vmatpush.bf16.msra.mxu0 %v1008
        %1030 = vmatpush.bf16.msra.mxu0 %v1007
        %1031 = vmatmul.bf16.gmra.mxu0 %v509
        %v1032 = vpop.f32.mrf.mxu0
        %v1033 = vadd.f32 0.0, %v1032
        %v1034 = vpop.f32.mrf.mxu0
        %v1035 = vadd.f32 0.0, %v1034
        %1036 = vmatmul.bf16.gmra.mxu0 %v510
        %v1037 = vpop.f32.mrf.mxu0
        %v1038 = vadd.f32 0.0, %v1037
        %v1039 = vpop.f32.mrf.mxu0
        %v1040 = vadd.f32 0.0, %v1039
        %1041 = vmatmul.bf16.gmra.mxu0 %v511
        %v1042 = vpop.f32.mrf.mxu0
        %v1043 = vadd.f32 0.0, %v1042
        %v1044 = vpop.f32.mrf.mxu0
        %v1045 = vadd.f32 0.0, %v1044
        %1046 = vmatmul.bf16.gmra.mxu0 %v512
        %v1047 = vpop.f32.mrf.mxu0
        %v1048 = vadd.f32 0.0, %v1047
        %v1049 = vpop.f32.mrf.mxu0
        %v1050 = vadd.f32 0.0, %v1049
        %1051 = vmatmul.bf16.gmra.mxu0 %v513
        %v1052 = vpop.f32.mrf.mxu0
        %v1053 = vadd.f32 0.0, %v1052
        %v1054 = vpop.f32.mrf.mxu0
        %v1055 = vadd.f32 0.0, %v1054
        %1056 = vmatmul.bf16.gmra.mxu0 %v514
        %v1057 = vpop.f32.mrf.mxu0
        %v1058 = vadd.f32 0.0, %v1057
        %v1059 = vpop.f32.mrf.mxu0
        %v1060 = vadd.f32 0.0, %v1059
        %1061 = vmatmul.bf16.gmra.mxu0 %v515
        %v1062 = vpop.f32.mrf.mxu0
        %v1063 = vadd.f32 0.0, %v1062
        %v1064 = vpop.f32.mrf.mxu0
        %v1065 = vadd.f32 0.0, %v1064
        %1066 = vmatmul.bf16.gmra.mxu0 %v516
        %v1067 = vpop.f32.mrf.mxu0
        %v1068 = vadd.f32 0.0, %v1067
        %v1069 = vpop.f32.mrf.mxu0
        %v1070 = vadd.f32 0.0, %v1069
        %1071 = vmatmul.bf16.gmra.mxu0 %v517
        %v1072 = vpop.f32.mrf.mxu0
        %v1073 = vadd.f32 0.0, %v1072
        %v1074 = vpop.f32.mrf.mxu0
        %v1075 = vadd.f32 0.0, %v1074
        %1076 = vmatmul.bf16.gmra.mxu0 %v518
        %v1077 = vpop.f32.mrf.mxu0
        %v1078 = vadd.f32 0.0, %v1077
        %v1079 = vpop.f32.mrf.mxu0
        %v1080 = vadd.f32 0.0, %v1079
        %1081 = vmatmul.bf16.gmra.mxu0 %v519
        %v1082 = vpop.f32.mrf.mxu0
        %v1083 = vadd.f32 0.0, %v1082
        %v1084 = vpop.f32.mrf.mxu0
        %v1085 = vadd.f32 0.0, %v1084
        %1086 = vmatmul.bf16.gmra.mxu0 %v520
        %v1087 = vpop.f32.mrf.mxu0
        %v1088 = vadd.f32 0.0, %v1087
        %v1089 = vpop.f32.mrf.mxu0
        %v1090 = vadd.f32 0.0, %v1089
        %1091 = vmatmul.bf16.gmra.mxu0 %v521
        %v1092 = vpop.f32.mrf.mxu0
        %v1093 = vadd.f32 0.0, %v1092
        %v1094 = vpop.f32.mrf.mxu0
        %v1095 = vadd.f32 0.0, %v1094
        %1096 = vmatmul.bf16.gmra.mxu0 %v522
        %v1097 = vpop.f32.mrf.mxu0
        %v1098 = vadd.f32 0.0, %v1097
        %v1099 = vpop.f32.mrf.mxu0
        %v1100 = vadd.f32 0.0, %v1099
        %1101 = vmatmul.bf16.gmra.mxu0 %v523
        %v1102 = vpop.f32.mrf.mxu0
        %v1103 = vadd.f32 0.0, %v1102
        %v1104 = vpop.f32.mrf.mxu0
        %v1105 = vadd.f32 0.0, %v1104
        %1106 = vmatmul.bf16.gmra.mxu0 %v524
        %v1107 = vpop.f32.mrf.mxu0
        %v1108 = vadd.f32 0.0, %v1107
        %v1109 = vpop.f32.mrf.mxu0
        %v1110 = vadd.f32 0.0, %v1109
        %1111 = vdwg.mxu0
        %v1112 = vpack.c.bf16 %v1033, %v1033
        %v1113 = vpack.c.bf16 %v1035, %v1035
        %v1114 = vpack.c.bf16 %v1038, %v1038
        %v1115 = vpack.c.bf16 %v1040, %v1040
        %v1116 = vpack.c.bf16 %v1043, %v1043
        %v1117 = vpack.c.bf16 %v1045, %v1045
        %v1118 = vpack.c.bf16 %v1048, %v1048
        %v1119 = vpack.c.bf16 %v1050, %v1050
        %v1120 = vpack.c.bf16 %v1053, %v1053
        %v1121 = vpack.c.bf16 %v1055, %v1055
        %v1122 = vpack.c.bf16 %v1058, %v1058
        %v1123 = vpack.c.bf16 %v1060, %v1060
        %v1124 = vpack.c.bf16 %v1063, %v1063
        %v1125 = vpack.c.bf16 %v1065, %v1065
        %v1126 = vpack.c.bf16 %v1068, %v1068
        %v1127 = vpack.c.bf16 %v1070, %v1070
        %v1128 = vpack.c.bf16 %v1073, %v1073
        %v1129 = vpack.c.bf16 %v1075, %v1075
        %v1130 = vpack.c.bf16 %v1078, %v1078
        %v1131 = vpack.c.bf16 %v1080, %v1080
        %v1132 = vpack.c.bf16 %v1083, %v1083
        %v1133 = vpack.c.bf16 %v1085, %v1085
        %v1134 = vpack.c.bf16 %v1088, %v1088
        %v1135 = vpack.c.bf16 %v1090, %v1090
        %v1136 = vpack.c.bf16 %v1093, %v1093
        %v1137 = vpack.c.bf16 %v1095, %v1095
        %v1138 = vpack.c.bf16 %v1098, %v1098
        %v1139 = vpack.c.bf16 %v1100, %v1100
        %v1140 = vpack.c.bf16 %v1103, %v1103
        %v1141 = vpack.c.bf16 %v1105, %v1105
        %v1142 = vpack.c.bf16 %v1108, %v1108
        %v1143 = vpack.c.bf16 %v1110, %v1110
        %1144 = vst [vmem:[%s388] sm:$0xf] %v1112
        %1145 = vst [vmem:[%s388 + $0x4] sm:$0xf] %v1113
        %1146 = vst [vmem:[%s388 + $0x8] sm:$0xf] %v1114
        %1147 = vst [vmem:[%s388 + $0xc] sm:$0xf] %v1115
        %1148 = vst [vmem:[%s388 + $0x10] sm:$0xf] %v1116
        %1149 = vst [vmem:[%s388 + $0x14] sm:$0xf] %v1117
        %1150 = vst [vmem:[%s388 + $0x18] sm:$0xf] %v1118
        %1151 = vst [vmem:[%s388 + $0x1c] sm:$0xf] %v1119
        %1152 = vst [vmem:[%s388 + $0x20] sm:$0xf] %v1120
        %1153 = vst [vmem:[%s388 + $0x24] sm:$0xf] %v1121
        %1154 = vst [vmem:[%s388 + $0x28] sm:$0xf] %v1122
        %1155 = vst [vmem:[%s388 + $0x2c] sm:$0xf] %v1123
        %1156 = vst [vmem:[%s388 + $0x30] sm:$0xf] %v1124
        %1157 = vst [vmem:[%s388 + $0x34] sm:$0xf] %v1125
        %1158 = vst [vmem:[%s388 + $0x38] sm:$0xf] %v1126
        %1159 = vst [vmem:[%s388 + $0x3c] sm:$0xf] %v1127
        %1160 = vst [vmem:[%s388 + $0x40] sm:$0xf] %v1128
        %1161 = vst [vmem:[%s388 + $0x44] sm:$0xf] %v1129
        %1162 = vst [vmem:[%s388 + $0x48] sm:$0xf] %v1130
        %1163 = vst [vmem:[%s388 + $0x4c] sm:$0xf] %v1131
        %1164 = vst [vmem:[%s388 + $0x50] sm:$0xf] %v1132
        %1165 = vst [vmem:[%s388 + $0x54] sm:$0xf] %v1133
        %1166 = vst [vmem:[%s388 + $0x58] sm:$0xf] %v1134
        %1167 = vst [vmem:[%s388 + $0x5c] sm:$0xf] %v1135
        %1168 = vst [vmem:[%s388 + $0x60] sm:$0xf] %v1136
        %1169 = vst [vmem:[%s388 + $0x64] sm:$0xf] %v1137
        %1170 = vst [vmem:[%s388 + $0x68] sm:$0xf] %v1138
        %1171 = vst [vmem:[%s388 + $0x6c] sm:$0xf] %v1139
        %1172 = vst [vmem:[%s388 + $0x70] sm:$0xf] %v1140
        %1173 = vst [vmem:[%s388 + $0x74] sm:$0xf] %v1141
        %1174 = vst [vmem:[%s388 + $0x78] sm:$0xf] %v1142
        %1175 = vst [vmem:[%s388 + $0x7c] sm:$0xf] %v1143
        %s1176 = sand.u32 %s164, 1
        %s1177 = scalar_lea.sflag [#allocation4], %s1176
        %s1178 = sand.u32 %s164, 1
        %s1179 = smul.addr %s1178, 128
        %s1180 = scalar_lea.vmem [#allocation10], %s1179
        %s1181 = sand.u32 %s30, 1
        %s1182 = scalar_lea.sflag [#allocation12], %s1181
        %s1183 = sand.u32 %s192, 1
        %s1184 = smul.addr %s1183, 128
        %s1185 = scalar_lea.vmem [#allocation11], %s1184
        %s1186 = sand.u32 %s30, 1
        %s1187 = scalar_lea.sflag [#allocation12], %s1186
        %s1188 = sand.u32 %s220, 1
        %s1189 = smul.addr %s1188, 128
        %s1190 = scalar_lea.vmem [#allocation13], %s1189
        // Predicated region
        $region57: #{tpu_custom_call.1} parent=39 // pred_check
          %p1191 = pneg %p174
        $region58: #{tpu_custom_call.1} parent=39 // pred_check_branch
          %1193 = sbr.rel (%p1191) target = $region60
        $region59: #{tpu_custom_call.1} parent=39 // pred_region
          %s1194 = smul.u32 32, %s35
          %1196 = vsyncadd %s1177, 0
          %s1197 = smul.addr %s34, 32
          %s1198 = sadd.s32 %s1194, %s1197
          %s1199 = smul.addr %s1198, 4
          %s1200 = scalar_lea.hbm %s5, %s1199
          %s1201 = sshll.u32 %s1180, 4
          %s1202 = int_to_ptr.vmem [resolvable:$true] %s1201
          %s1203 = sshll.u32 %s1200, 4
          %s1204 = int_to_ptr.hbm [resolvable:$true] %s1203
          %1209 = dma.vmem_to_hbm [thread:$0]  %s1202, 2048, %s1204, %s1177, 64, 64, 4
        $region60: #{tpu_custom_call.1} parent=39 // pred_fallthru
          _
        // Predicated region
        $region61: #{tpu_custom_call.1} parent=39 // pred_check
          %p1210 = pneg %p202
        $region62: #{tpu_custom_call.1} parent=39 // pred_check_branch
          %1212 = sbr.rel (%p1210) target = $region64
        $region63: #{tpu_custom_call.1} parent=39 // pred_region
          %s1213 = smul.u32 32, %s35
          %1215 = vsyncadd %s1182, 0
          %s1216 = smul.addr %s34, 32
          %s1217 = sadd.s32 %s1213, %s1216
          %s1218 = smul.addr %s1217, 4
          %s1219 = scalar_lea.hbm %s6, %s1218
          %s1220 = sshll.u32 %s1185, 4
          %s1221 = int_to_ptr.vmem [resolvable:$true] %s1220
          %s1222 = sshll.u32 %s1219, 4
          %s1223 = int_to_ptr.hbm [resolvable:$true] %s1222
          %1228 = dma.vmem_to_hbm [thread:$0]  %s1221, 2048, %s1223, %s1182, 64, 64, 4
        $region64: #{tpu_custom_call.1} parent=39 // pred_fallthru
          _
        // Predicated region
        $region65: #{tpu_custom_call.1} parent=39 // pred_check
          %p1229 = pneg %p230
        $region66: #{tpu_custom_call.1} parent=39 // pred_check_branch
          %1231 = sbr.rel (%p1229) target = $region68
        $region67: #{tpu_custom_call.1} parent=39 // pred_region
          %s1232 = smul.u32 32, %s35
          %1234 = vsyncadd %s1187, 0
          %s1235 = smul.addr %s34, 32
          %s1236 = sadd.s32 %s1232, %s1235
          %s1237 = smul.addr %s1236, 4
          %s1238 = scalar_lea.hbm %s7, %s1237
          %s1239 = sshll.u32 %s1190, 4
          %s1240 = int_to_ptr.vmem [resolvable:$true] %s1239
          %s1241 = sshll.u32 %s1238, 4
          %s1242 = int_to_ptr.hbm [resolvable:$true] %s1241
          %1247 = dma.vmem_to_hbm [thread:$0]  %s1240, 2048, %s1242, %s1187, 64, 64, 4
        $region68: #{tpu_custom_call.1} parent=39 // pred_fallthru
          _
      $region40: #{tpu_custom_call.1} parent=5 // pred_fallthru
        _
      %p1248 = scmp.le.s32.totalorder 2, %s25
      // Predicated region
      $region69: #{tpu_custom_call.1} parent=5 // pred_check
        %p1249 = pneg %p1248
      $region70: #{tpu_custom_call.1} parent=5 // pred_check_branch
        %1251 = sbr.rel (%p1249) target = $region72
      $region71: #{tpu_custom_call.1} parent=5 // pred_region
        %s1252 = ssub.s32 %s25, 2
        // Predicated region
        $region73: #{tpu_custom_call.1} parent=71 // pred_check
          %p1253 = pneg %p180
        $region74: #{tpu_custom_call.1} parent=71 // pred_check_branch
          %1255 = sbr.rel (%p1253) target = $region76
        $region75: #{tpu_custom_call.1} parent=71 // pred_region
          %s1256 = sand.u32 %s165, 1
          %s1257 = scalar_lea.sflag [#allocation4], %s1256
          %s1258 = sand.u32 %s165, 1
          %s1259 = smul.addr %s1258, 128
          %s1260 = scalar_lea.vmem [#allocation10], %s1259
          %1262 = dma.done %s1257, 2048
        $region76: #{tpu_custom_call.1} parent=71 // pred_fallthru
          _
        // Predicated region
        $region77: #{tpu_custom_call.1} parent=71 // pred_check
          %p1263 = pneg %p208
        $region78: #{tpu_custom_call.1} parent=71 // pred_check_branch
          %1265 = sbr.rel (%p1263) target = $region80
        $region79: #{tpu_custom_call.1} parent=71 // pred_region
          %s1266 = sand.u32 %s31, 1
          %s1267 = scalar_lea.sflag [#allocation12], %s1266
          %s1268 = sand.u32 %s193, 1
          %s1269 = smul.addr %s1268, 128
          %s1270 = scalar_lea.vmem [#allocation11], %s1269
          %1272 = dma.done %s1267, 2048
        $region80: #{tpu_custom_call.1} parent=71 // pred_fallthru
          _
        // Predicated region
        $region81: #{tpu_custom_call.1} parent=71 // pred_check
          %p1273 = pneg %p236
        $region82: #{tpu_custom_call.1} parent=71 // pred_check_branch
          %1275 = sbr.rel (%p1273) target = $region84
        $region83: #{tpu_custom_call.1} parent=71 // pred_region
          %s1276 = sand.u32 %s31, 1
          %s1277 = scalar_lea.sflag [#allocation12], %s1276
          %s1278 = sand.u32 %s221, 1
          %s1279 = smul.addr %s1278, 128
          %s1280 = scalar_lea.vmem [#allocation13], %s1279
          %1282 = dma.done %s1277, 2048
        $region84: #{tpu_custom_call.1} parent=71 // pred_fallthru
          _
      $region72: #{tpu_custom_call.1} parent=5 // pred_fallthru
        _
    $region6: #{tpu_custom_call.1} parent=1 // loop_footer
      %s29 = sadd.s32 1, %s25
    $region7: #{tpu_custom_call.1} parent=1 // loop_footer_branch
      %24 = sbr.rel target = $region3
    $region8: #{tpu_custom_call.1} parent=1 // loop_exit
      _
    %1283 = vsyncpa [#allocation3], 1
    %s1284 = scalar_lea.sflag [#allocation3], 1
    %1285 = vsyncpa %s1284, 1
    %1286 = vsyncpa [#allocation6], 1
    %1287 = vsyncpa [#allocation9], 1
    %1288 = vsyncpa [#allocation4], 1
    %s1289 = scalar_lea.sflag [#allocation4], 1
    %1290 = vsyncpa %s1289, 1
    %1291 = vsyncpa [#allocation12], 1
    %s1292 = scalar_lea.sflag [#allocation12], 1
    %1293 = vsyncpa %s1292, 1

</llo_original>
